<compile_context>
chip_gen: v5e
topology: v5e:2x2
jax: 0.10.0
libtpu: 0.0.40
codegen_flags: <defaults>
</compile_context>

<pallas_src>
import jax
import jax.numpy as jnp
from jax.experimental import pallas as pl
from jax.experimental.pallas import tpu as pltpu


def make_variance_predictor_kernel(*, n_layer, kernel_size, seq_len, rows,
                                   c_in, filt, ln_eps=1e-5):
    pad = (kernel_size - 1) // 2
    inv_f = 1.0 / float(filt)

    def kernel(x_ref, keep_ref, wconv_ref, vec_ref, wlin_ref, blin_ref, o_ref):
        keep = keep_ref[...]                          # (rows, 1) f32; 1 = keep
        vec = vec_ref[...]                            # (3*n_layer, F) f32

        # Layer-invariant conv-halo masks (hoisted out of the layer loop).
        row = jax.lax.broadcasted_iota(jnp.int32, (rows, 1), 0)
        tpos = row % seq_len                          # position within each sequence
        valid = {}
        for t in range(kernel_size):
            d = t - pad
            if d != 0:
                valid[d] = jnp.logical_and(tpos + d >= 0, tpos + d < seq_len)

        # Rolls stay 32-bit (packed-sublane rotate safety); MXU taps are bf16.
        h = x_ref[...].astype(jnp.float32)            # (rows, C)

        for l in range(n_layer):
            cin_l = h.shape[1]                        # C for layer 0, F afterwards
            w_l = wconv_ref[l]                        # (K*C, F) bf16

            # Conv1d(pad=(k-1)//2) as K accumulated matmuls over rolled taps.
            acc = None
            for t in range(kernel_size):
                d = t - pad
                if d == 0:
                    piece = h
                else:
                    piece = pltpu.roll(h, shift=(-d) % rows, axis=0)
                    piece = jnp.where(valid[d], piece, 0.0)
                w_t = w_l[t * c_in:t * c_in + cin_l, :]               # (cin_l, F)
                part = jnp.dot(piece.astype(jnp.bfloat16), w_t,
                               preferred_element_type=jnp.float32)    # (rows, F) f32
                acc = part if acc is None else acc + part

            b = vec[3 * l:3 * l + 1, :]               # (1, F) conv bias
            g = vec[3 * l + 1:3 * l + 2, :]           # (1, F) LN gamma
            be = vec[3 * l + 2:3 * l + 3, :]          # (1, F) LN beta

            # Bias + ReLU
            hr = jnp.maximum(acc + b, 0.0)

            # LayerNorm over channels, two-pass (no E[x^2]-mean^2 cancellation)
            mean = jnp.sum(hr, axis=-1, keepdims=True) * inv_f
            cent = hr - mean
            var = jnp.sum(cent * cent, axis=-1, keepdims=True) * inv_f
            h = cent * jax.lax.rsqrt(var + ln_eps)
            h = h * g + be
            # Dropout: inference semantics (identity)

        # Final Linear into a lane-dense 128-wide slab, masked_fill, bf16 store.
        out = jnp.dot(h.astype(jnp.bfloat16), wlin_ref[...],
                      preferred_element_type=jnp.float32)             # (rows, COUT_PAD)
        out = (out + blin_ref[...]) * keep
        o_ref[...] = out.astype(o_ref.dtype)

    return kernel


def _pick_batch_tile(batch, seq_len, c, filt, cout_pad):
    """Batch elements per grid step: whole sequences only, sized for VMEM."""
    try:
        kind = jax.devices()[0].device_kind.lower()
    except Exception:
        kind = ""
    # v7x has 64 MiB VMEM (vs 128 MiB on v5e/v6e): halve the activation budget.
    budget = (3 if "7" in kind else 6) * 1024 * 1024
    cmax = max(c, filt)
    # Rough per-row live bytes: f32 h / rolled piece / acc / centered / out-f32 temp
    # + bf16 tap + double-buffered in/out blocks.
    per_row = 4 * (2 * cmax + 2 * filt + cout_pad) + 2 * (cmax + 2 * (c + cout_pad))
    g_max = max(1, min(batch, budget // max(1, per_row * seq_len)))
    for g in range(g_max, 0, -1):
        # block rows must be a multiple of 16 (bf16 sublane tile) or the full array
        if batch % g == 0 and ((g * seq_len) % 16 == 0 or g == batch):
            return g
    return batch


def variance_predictor(x, mask, params, *, n_layer, kernel_size, ln_eps=1e-5):
    """x: (B, T, H) float32, mask: (B, T) bool (True = padded -> zeroed output).

    params: dict with keys:
      conv_w[l]: (k, Cin_l, F), conv_b[l]: (1, F),
      ln_g[l]: (1, F), ln_b[l]: (1, F),
      lin_w: (F, Cout), lin_b: (1, Cout)
    """
    B, T, H = x.shape
    K = kernel_size
    F = params["conv_w"][0].shape[2]
    Cout = params["lin_w"].shape[1]
    C = max(H, F)                                    # unified channel width
    COUT_PAD = max(128, ((Cout + 127) // 128) * 128)  # lane-dense output slab
    N = B * T

    # ---- activations: flatten, channel-pad, pre-cast to bf16 (halves DMA) ----
    xf = x.reshape(N, H).astype(jnp.float32)
    if H < C:
        xf = jnp.pad(xf, ((0, 0), (0, C - H)))
    xf = xf.astype(jnp.bfloat16)
    keep = jnp.logical_not(mask).astype(jnp.float32).reshape(N, 1)

    # ---- coalesced parameters (bf16 matmul operands, f32 vectors) ----
    w_stack = []
    for l in range(n_layer):
        w = params["conv_w"][l]                      # (K, Cin_l, F)
        cin = w.shape[1]
        if cin < C:
            w = jnp.pad(w, ((0, 0), (0, C - cin), (0, 0)))
        w_stack.append(w.reshape(K * C, F))
    w_conv = jnp.stack(w_stack, axis=0).astype(jnp.bfloat16)      # (n_layer, K*C, F)

    vec = jnp.concatenate(
        [jnp.concatenate([params["conv_b"][l], params["ln_g"][l], params["ln_b"][l]],
                         axis=0)
         for l in range(n_layer)], axis=0).astype(jnp.float32)    # (3*n_layer, F)

    w_lin = jnp.zeros((F, COUT_PAD), jnp.float32).at[:, :Cout].set(params["lin_w"])
    w_lin = w_lin.astype(jnp.bfloat16)
    b_lin = jnp.zeros((1, COUT_PAD), jnp.float32).at[:, :Cout].set(params["lin_b"])

    # ---- batch-aligned row tiling (enables pipelining + megacore sharding) ----
    g = _pick_batch_tile(B, T, C, F, COUT_PAD)
    rows = g * T
    num_blocks = B // g

    kernel = make_variance_predictor_kernel(
        n_layer=n_layer, kernel_size=K, seq_len=T, rows=rows,
        c_in=C, filt=F, ln_eps=ln_eps)

    flops = 2 * N * F * (K * C + (n_layer - 1) * K * F + COUT_PAD)
    bytes_accessed = (xf.size * 2 + keep.size * 4 + w_conv.size * 2 + vec.size * 4
                      + w_lin.size * 2 + b_lin.size * 4 + N * COUT_PAD * 2)

    out_pad = pl.pallas_call(
        kernel,
        out_shape=jax.ShapeDtypeStruct((N, COUT_PAD), jnp.bfloat16),
        grid_spec=pltpu.PrefetchScalarGridSpec(
            num_scalar_prefetch=0,
            grid=(num_blocks,),
            in_specs=[
                pl.BlockSpec((rows, C), lambda i: (i, 0)),               # x (bf16)
                pl.BlockSpec((rows, 1), lambda i: (i, 0)),               # keep mask
                pl.BlockSpec((n_layer, K * C, F), lambda i: (0, 0, 0)),  # conv weights
                pl.BlockSpec((3 * n_layer, F), lambda i: (0, 0)),        # conv_b/ln_g/ln_b
                pl.BlockSpec((F, COUT_PAD), lambda i: (0, 0)),           # lin_w (bf16)
                pl.BlockSpec((1, COUT_PAD), lambda i: (0, 0)),           # lin_b
            ],
            out_specs=pl.BlockSpec((rows, COUT_PAD), lambda i: (i, 0)),
        ),
        compiler_params=pltpu.CompilerParams(
            dimension_semantics=("parallel",),
            vmem_limit_bytes=32 * 1024 * 1024),
        cost_estimate=pl.CostEstimate(
            flops=int(flops),
            transcendentals=int(N * n_layer),
            bytes_accessed=int(bytes_accessed)),
    )(xf, keep, w_conv, vec, w_lin, b_lin)

    return out_pad[:, :Cout].astype(jnp.float32).reshape(B, T, Cout)


def variance_predictor_ref(x, mask, params, *, n_layer, kernel_size, ln_eps=1e-5):
    """Pure-JAX reference (eval-mode dropout); mirrors the kernel's bf16 MXU inputs
    and its bf16 output storage."""
    pad_ = (kernel_size - 1) // 2
    B, T, _ = x.shape
    h = x.astype(jnp.float32)
    for l in range(n_layer):
        w = params["conv_w"][l].astype(jnp.bfloat16)      # (k, Cin, F)
        xp = jnp.pad(h, ((0, 0), (pad_, pad_), (0, 0))).astype(jnp.bfloat16)
        acc = sum(jnp.einsum("btc,cf->btf", xp[:, t:t + T, :], w[t],
                             preferred_element_type=jnp.float32)
                  for t in range(kernel_size))
        h = acc + params["conv_b"][l][None]
        h = jnp.maximum(h, 0.0)
        mean = jnp.mean(h, axis=-1, keepdims=True)
        var = jnp.mean(jnp.square(h - mean), axis=-1, keepdims=True)
        h = (h - mean) * jax.lax.rsqrt(var + ln_eps)
        h = h * params["ln_g"][l][None] + params["ln_b"][l][None]
    out = jnp.einsum("btf,fo->bto", h.astype(jnp.bfloat16),
                     params["lin_w"].astype(jnp.bfloat16),
                     preferred_element_type=jnp.float32) + params["lin_b"][None]
    out = jnp.where(mask[..., None], 0.0, out)
    return out.astype(jnp.bfloat16).astype(jnp.float32)   # kernel stores bf16


if __name__ == "__main__":
    # cfg: encoder_hidden=32, filter_size=32, kernel_size=3, dropout=0.5,
    #      output_channels=2, n_layer=2
    B, T = 2, 16
    H = 32          # encoder_hidden
    F = 32          # filter_size
    K = 3           # kernel_size
    COUT = 2        # output_channels
    NL = 2          # n_layer

    key = jax.random.PRNGKey(0)
    keys = jax.random.split(key, 4 + 2 * NL)

    x = jax.random.normal(keys[0], (B, T, H), jnp.float32)
    # mask: True for padded positions (last few frames of batch 1)
    lengths = jnp.array([T, T - 5])
    mask = jnp.arange(T)[None, :] >= lengths[:, None]          # (B, T) bool

    params = {"conv_w": [], "conv_b": [], "ln_g": [], "ln_b": []}
    for l in range(NL):
        cin = H if l == 0 else F
        params["conv_w"].append(
            0.1 * jax.random.normal(keys[2 + 2 * l], (K, cin, F), jnp.float32))
        params["conv_b"].append(
            0.01 * jax.random.normal(keys[3 + 2 * l], (1, F), jnp.float32))
        params["ln_g"].append(jnp.ones((1, F), jnp.float32))
        params["ln_b"].append(jnp.zeros((1, F), jnp.float32))
    params["lin_w"] = 0.1 * jax.random.normal(keys[1], (F, COUT), jnp.float32)
    params["lin_b"] = 0.01 * jax.random.normal(keys[-1], (1, COUT), jnp.float32)

    out = variance_predictor(x, mask, params, n_layer=NL, kernel_size=K)
    out = jax.block_until_ready(out)

    ref = variance_predictor_ref(x, mask, params, n_layer=NL, kernel_size=K)
    assert out.shape == (B, T, COUT)
    # rtol covers the 1-ulp bf16 output rounding; atol covers small f32 accumulation
    # order differences between the kernel's dots and the reference einsums.
    assert jnp.allclose(out, ref, atol=5e-3, rtol=1e-2), "mismatch vs JAX reference"

    print("KERNEL_OK")
</pallas_src>

<mosaic_0001>
module attributes {stable_mosaic.version = 11 : i64} {
  func.func @kernel(%arg0: i32, %arg1: memref<32x32xbf16, #tpu.memory_space<vmem>>, %arg2: memref<32x1xf32, #tpu.memory_space<vmem>>, %arg3: memref<2x96x32xbf16, #tpu.memory_space<vmem>>, %arg4: memref<6x32xf32, #tpu.memory_space<vmem>>, %arg5: memref<32x128xbf16, #tpu.memory_space<vmem>>, %arg6: memref<1x128xf32, #tpu.memory_space<vmem>>, %arg7: memref<32x128xbf16, #tpu.memory_space<vmem>>) attributes {dimension_semantics = [#tpu.dimension_semantics<parallel>], iteration_bounds = array<i64: 1>, scalar_prefetch = 0 : i64, scratch_operands = 0 : i64, tpu.core_type = #tpu.core_type<tc>, window_params = [{transform_indices = @transform_0, window_bounds = array<i64: 32, 32>}, {transform_indices = @transform_1, window_bounds = array<i64: 32, 1>}, {pipeline_mode = #tpu.pipeline_mode<synchronous>, transform_indices = @transform_2, window_bounds = array<i64: 2, 96, 32>}, {pipeline_mode = #tpu.pipeline_mode<synchronous>, transform_indices = @transform_3, window_bounds = array<i64: 6, 32>}, {pipeline_mode = #tpu.pipeline_mode<synchronous>, transform_indices = @transform_4, window_bounds = array<i64: 32, 128>}, {pipeline_mode = #tpu.pipeline_mode<synchronous>, transform_indices = @transform_5, window_bounds = array<i64: 1, 128>}, {transform_indices = @transform_6, window_bounds = array<i64: 32, 128>}]} {
    %c0 = arith.constant 0 : index
    %c0_0 = arith.constant 0 : index
    %0 = vector.load %arg2[%c0, %c0_0] : memref<32x1xf32, #tpu.memory_space<vmem>>, vector<32x1xf32>
    %c0_1 = arith.constant 0 : index
    %c0_2 = arith.constant 0 : index
    %1 = vector.load %arg4[%c0_1, %c0_2] : memref<6x32xf32, #tpu.memory_space<vmem>>, vector<6x32xf32>
    %2 = tpu.iota {dimensions = array<i32: 0>} : vector<32x1xi32>
    %c16_i32 = arith.constant 16 : i32
    %c0_i32 = arith.constant 0 : i32
    %3 = arith.cmpi eq, %c16_i32, %c0_i32 : i32
    %c1_i32 = arith.constant 1 : i32
    %4 = arith.select %3, %c1_i32, %c16_i32 : i32
    %5 = vector.broadcast %4 : i32 to vector<32x1xi32>
    %6 = arith.remsi %2, %5 : vector<32x1xi32>
    %c0_i32_3 = arith.constant 0 : i32
    %7 = vector.broadcast %c0_i32_3 : i32 to vector<32x1xi32>
    %8 = arith.cmpi ne, %6, %7 : vector<32x1xi32>
    %c0_i32_4 = arith.constant 0 : i32
    %9 = vector.broadcast %c0_i32_4 : i32 to vector<32x1xi32>
    %10 = arith.cmpi slt, %6, %9 : vector<32x1xi32>
    %c0_i32_5 = arith.constant 0 : i32
    %11 = arith.cmpi slt, %4, %c0_i32_5 : i32
    %12 = vector.broadcast %11 : i1 to vector<32x1xi1>
    %13 = vector.broadcast %12 : vector<32x1xi1> to vector<32x1xi1>
    %14 = arith.xori %10, %13 : vector<32x1xi1>
    %15 = arith.andi %14, %8 : vector<32x1xi1>
    %16 = vector.broadcast %4 : i32 to vector<32x1xi32>
    %17 = arith.addi %6, %16 : vector<32x1xi32>
    %18 = arith.select %15, %17, %6 : vector<32x1xi1>, vector<32x1xi32>
    %c-1_i32 = arith.constant -1 : i32
    %19 = vector.broadcast %c-1_i32 : i32 to vector<32x1xi32>
    %20 = arith.addi %18, %19 : vector<32x1xi32>
    %c0_i32_6 = arith.constant 0 : i32
    %21 = vector.broadcast %c0_i32_6 : i32 to vector<32x1xi32>
    %22 = arith.cmpi sge, %20, %21 : vector<32x1xi32>
    %c-1_i32_7 = arith.constant -1 : i32
    %23 = vector.broadcast %c-1_i32_7 : i32 to vector<32x1xi32>
    %24 = arith.addi %18, %23 : vector<32x1xi32>
    %c16_i32_8 = arith.constant 16 : i32
    %25 = vector.broadcast %c16_i32_8 : i32 to vector<32x1xi32>
    %26 = arith.cmpi slt, %24, %25 : vector<32x1xi32>
    %27 = arith.andi %22, %26 : vector<32x1xi1>
    %c1_i32_9 = arith.constant 1 : i32
    %28 = vector.broadcast %c1_i32_9 : i32 to vector<32x1xi32>
    %29 = arith.addi %18, %28 : vector<32x1xi32>
    %c0_i32_10 = arith.constant 0 : i32
    %30 = vector.broadcast %c0_i32_10 : i32 to vector<32x1xi32>
    %31 = arith.cmpi sge, %29, %30 : vector<32x1xi32>
    %c1_i32_11 = arith.constant 1 : i32
    %32 = vector.broadcast %c1_i32_11 : i32 to vector<32x1xi32>
    %33 = arith.addi %18, %32 : vector<32x1xi32>
    %c16_i32_12 = arith.constant 16 : i32
    %34 = vector.broadcast %c16_i32_12 : i32 to vector<32x1xi32>
    %35 = arith.cmpi slt, %33, %34 : vector<32x1xi32>
    %36 = arith.andi %31, %35 : vector<32x1xi1>
    %c0_13 = arith.constant 0 : index
    %c0_14 = arith.constant 0 : index
    %37 = vector.load %arg1[%c0_13, %c0_14] : memref<32x32xbf16, #tpu.memory_space<vmem>>, vector<32x32xbf16>
    %38 = arith.extf %37 : vector<32x32xbf16> to vector<32x32xf32>
    %c0_15 = arith.constant 0 : index
    %c0_16 = arith.constant 0 : index
    %c0_17 = arith.constant 0 : index
    %39 = vector.load %arg3[%c0_15, %c0_16, %c0_17] : memref<2x96x32xbf16, #tpu.memory_space<vmem>>, vector<1x96x32xbf16>
    %40 = vector.shape_cast %39 : vector<1x96x32xbf16> to vector<96x32xbf16>
    %c1_i32_18 = arith.constant 1 : i32
    %41 = tpu.dynamic_rotate %38 by %c1_i32_18 dim 0 : vector<32x32xf32>, i32 -> vector<32x32xf32>
    %cst = arith.constant 0.000000e+00 : f32
    %42 = vector.shape_cast %27 : vector<32x1xi1> to vector<32x1xi1>
    %43 = vector.broadcast %42 : vector<32x1xi1> to vector<32x32xi1>
    %44 = vector.broadcast %cst : f32 to vector<32x32xf32>
    %45 = arith.select %43, %41, %44 : vector<32x32xi1>, vector<32x32xf32>
    %46 = vector.extract_strided_slice %40 {offsets = [0, 0], sizes = [32, 32], strides = [1, 1]} : vector<96x32xbf16> to vector<32x32xbf16>
    %47 = arith.truncf %45 : vector<32x32xf32> to vector<32x32xbf16>
    %cst_19 = arith.constant dense<0.000000e+00> : vector<32x32xf32>
    %48 = tpu.matmul %47, %46, %cst_19 {dimension_numbers = #tpu.dot_dimension_numbers<[1], [0], [0], [1], [0, 0, 1, 1], [], []>} : vector<32x32xbf16>, vector<32x32xbf16>, vector<32x32xf32> -> vector<32x32xf32>
    %49 = vector.extract_strided_slice %40 {offsets = [32, 0], sizes = [32, 32], strides = [1, 1]} : vector<96x32xbf16> to vector<32x32xbf16>
    %50 = arith.truncf %38 : vector<32x32xf32> to vector<32x32xbf16>
    %cst_20 = arith.constant dense<0.000000e+00> : vector<32x32xf32>
    %51 = tpu.matmul %50, %49, %cst_20 {dimension_numbers = #tpu.dot_dimension_numbers<[1], [0], [0], [1], [0, 0, 1, 1], [], []>} : vector<32x32xbf16>, vector<32x32xbf16>, vector<32x32xf32> -> vector<32x32xf32>
    %52 = arith.addf %48, %51 : vector<32x32xf32>
    %c31_i32 = arith.constant 31 : i32
    %53 = tpu.dynamic_rotate %38 by %c31_i32 dim 0 : vector<32x32xf32>, i32 -> vector<32x32xf32>
    %cst_21 = arith.constant 0.000000e+00 : f32
    %54 = vector.shape_cast %36 : vector<32x1xi1> to vector<32x1xi1>
    %55 = vector.broadcast %54 : vector<32x1xi1> to vector<32x32xi1>
    %56 = vector.broadcast %cst_21 : f32 to vector<32x32xf32>
    %57 = arith.select %55, %53, %56 : vector<32x32xi1>, vector<32x32xf32>
    %58 = vector.extract_strided_slice %40 {offsets = [64, 0], sizes = [32, 32], strides = [1, 1]} : vector<96x32xbf16> to vector<32x32xbf16>
    %59 = arith.truncf %57 : vector<32x32xf32> to vector<32x32xbf16>
    %cst_22 = arith.constant dense<0.000000e+00> : vector<32x32xf32>
    %60 = tpu.matmul %59, %58, %cst_22 {dimension_numbers = #tpu.dot_dimension_numbers<[1], [0], [0], [1], [0, 0, 1, 1], [], []>} : vector<32x32xbf16>, vector<32x32xbf16>, vector<32x32xf32> -> vector<32x32xf32>
    %61 = arith.addf %52, %60 : vector<32x32xf32>
    %62 = vector.extract_strided_slice %1 {offsets = [0, 0], sizes = [1, 32], strides = [1, 1]} : vector<6x32xf32> to vector<1x32xf32>
    %63 = vector.extract_strided_slice %1 {offsets = [1, 0], sizes = [1, 32], strides = [1, 1]} : vector<6x32xf32> to vector<1x32xf32>
    %64 = vector.extract_strided_slice %1 {offsets = [2, 0], sizes = [1, 32], strides = [1, 1]} : vector<6x32xf32> to vector<1x32xf32>
    %65 = vector.broadcast %62 : vector<1x32xf32> to vector<32x32xf32>
    %66 = arith.addf %61, %65 : vector<32x32xf32>
    %cst_23 = arith.constant 0.000000e+00 : f32
    %67 = vector.broadcast %cst_23 : f32 to vector<32x32xf32>
    %68 = arith.maximumf %66, %67 : vector<32x32xf32>
    %cst_24 = arith.constant dense<0.000000e+00> : vector<32xf32>
    %69 = vector.multi_reduction <add>, %68, %cst_24 [1] : vector<32x32xf32> to vector<32xf32>
    %70 = vector.shape_cast %69 : vector<32xf32> to vector<32x1xf32>
    %cst_25 = arith.constant 3.125000e-02 : f32
    %71 = vector.broadcast %cst_25 : f32 to vector<32x1xf32>
    %72 = arith.mulf %70, %71 : vector<32x1xf32>
    %73 = vector.broadcast %72 : vector<32x1xf32> to vector<32x32xf32>
    %74 = arith.subf %68, %73 : vector<32x32xf32>
    %75 = arith.mulf %74, %74 : vector<32x32xf32>
    %cst_26 = arith.constant dense<0.000000e+00> : vector<32xf32>
    %76 = vector.multi_reduction <add>, %75, %cst_26 [1] : vector<32x32xf32> to vector<32xf32>
    %77 = vector.shape_cast %76 : vector<32xf32> to vector<32x1xf32>
    %cst_27 = arith.constant 3.125000e-02 : f32
    %78 = vector.broadcast %cst_27 : f32 to vector<32x1xf32>
    %79 = arith.mulf %77, %78 : vector<32x1xf32>
    %cst_28 = arith.constant 9.99999974E-6 : f32
    %80 = vector.broadcast %cst_28 : f32 to vector<32x1xf32>
    %81 = arith.addf %79, %80 : vector<32x1xf32>
    %82 = math.rsqrt %81 : vector<32x1xf32>
    %83 = vector.broadcast %82 : vector<32x1xf32> to vector<32x32xf32>
    %84 = arith.mulf %74, %83 : vector<32x32xf32>
    %85 = vector.broadcast %63 : vector<1x32xf32> to vector<32x32xf32>
    %86 = arith.mulf %84, %85 : vector<32x32xf32>
    %87 = vector.broadcast %64 : vector<1x32xf32> to vector<32x32xf32>
    %88 = arith.addf %86, %87 : vector<32x32xf32>
    %c1 = arith.constant 1 : index
    %c0_29 = arith.constant 0 : index
    %c0_30 = arith.constant 0 : index
    %89 = vector.load %arg3[%c1, %c0_29, %c0_30] : memref<2x96x32xbf16, #tpu.memory_space<vmem>>, vector<1x96x32xbf16>
    %90 = vector.shape_cast %89 : vector<1x96x32xbf16> to vector<96x32xbf16>
    %c1_i32_31 = arith.constant 1 : i32
    %91 = tpu.dynamic_rotate %88 by %c1_i32_31 dim 0 : vector<32x32xf32>, i32 -> vector<32x32xf32>
    %cst_32 = arith.constant 0.000000e+00 : f32
    %92 = vector.shape_cast %27 : vector<32x1xi1> to vector<32x1xi1>
    %93 = vector.broadcast %92 : vector<32x1xi1> to vector<32x32xi1>
    %94 = vector.broadcast %cst_32 : f32 to vector<32x32xf32>
    %95 = arith.select %93, %91, %94 : vector<32x32xi1>, vector<32x32xf32>
    %96 = vector.extract_strided_slice %90 {offsets = [0, 0], sizes = [32, 32], strides = [1, 1]} : vector<96x32xbf16> to vector<32x32xbf16>
    %97 = arith.truncf %95 : vector<32x32xf32> to vector<32x32xbf16>
    %cst_33 = arith.constant dense<0.000000e+00> : vector<32x32xf32>
    %98 = tpu.matmul %97, %96, %cst_33 {dimension_numbers = #tpu.dot_dimension_numbers<[1], [0], [0], [1], [0, 0, 1, 1], [], []>} : vector<32x32xbf16>, vector<32x32xbf16>, vector<32x32xf32> -> vector<32x32xf32>
    %99 = vector.extract_strided_slice %90 {offsets = [32, 0], sizes = [32, 32], strides = [1, 1]} : vector<96x32xbf16> to vector<32x32xbf16>
    %100 = arith.truncf %88 : vector<32x32xf32> to vector<32x32xbf16>
    %cst_34 = arith.constant dense<0.000000e+00> : vector<32x32xf32>
    %101 = tpu.matmul %100, %99, %cst_34 {dimension_numbers = #tpu.dot_dimension_numbers<[1], [0], [0], [1], [0, 0, 1, 1], [], []>} : vector<32x32xbf16>, vector<32x32xbf16>, vector<32x32xf32> -> vector<32x32xf32>
    %102 = arith.addf %98, %101 : vector<32x32xf32>
    %c31_i32_35 = arith.constant 31 : i32
    %103 = tpu.dynamic_rotate %88 by %c31_i32_35 dim 0 : vector<32x32xf32>, i32 -> vector<32x32xf32>
    %cst_36 = arith.constant 0.000000e+00 : f32
    %104 = vector.shape_cast %36 : vector<32x1xi1> to vector<32x1xi1>
    %105 = vector.broadcast %104 : vector<32x1xi1> to vector<32x32xi1>
    %106 = vector.broadcast %cst_36 : f32 to vector<32x32xf32>
    %107 = arith.select %105, %103, %106 : vector<32x32xi1>, vector<32x32xf32>
    %108 = vector.extract_strided_slice %90 {offsets = [64, 0], sizes = [32, 32], strides = [1, 1]} : vector<96x32xbf16> to vector<32x32xbf16>
    %109 = arith.truncf %107 : vector<32x32xf32> to vector<32x32xbf16>
    %cst_37 = arith.constant dense<0.000000e+00> : vector<32x32xf32>
    %110 = tpu.matmul %109, %108, %cst_37 {dimension_numbers = #tpu.dot_dimension_numbers<[1], [0], [0], [1], [0, 0, 1, 1], [], []>} : vector<32x32xbf16>, vector<32x32xbf16>, vector<32x32xf32> -> vector<32x32xf32>
    %111 = arith.addf %102, %110 : vector<32x32xf32>
    %112 = vector.extract_strided_slice %1 {offsets = [3, 0], sizes = [1, 32], strides = [1, 1]} : vector<6x32xf32> to vector<1x32xf32>
    %113 = vector.extract_strided_slice %1 {offsets = [4, 0], sizes = [1, 32], strides = [1, 1]} : vector<6x32xf32> to vector<1x32xf32>
    %114 = vector.extract_strided_slice %1 {offsets = [5, 0], sizes = [1, 32], strides = [1, 1]} : vector<6x32xf32> to vector<1x32xf32>
    %115 = vector.broadcast %112 : vector<1x32xf32> to vector<32x32xf32>
    %116 = arith.addf %111, %115 : vector<32x32xf32>
    %cst_38 = arith.constant 0.000000e+00 : f32
    %117 = vector.broadcast %cst_38 : f32 to vector<32x32xf32>
    %118 = arith.maximumf %116, %117 : vector<32x32xf32>
    %cst_39 = arith.constant dense<0.000000e+00> : vector<32xf32>
    %119 = vector.multi_reduction <add>, %118, %cst_39 [1] : vector<32x32xf32> to vector<32xf32>
    %120 = vector.shape_cast %119 : vector<32xf32> to vector<32x1xf32>
    %cst_40 = arith.constant 3.125000e-02 : f32
    %121 = vector.broadcast %cst_40 : f32 to vector<32x1xf32>
    %122 = arith.mulf %120, %121 : vector<32x1xf32>
    %123 = vector.broadcast %122 : vector<32x1xf32> to vector<32x32xf32>
    %124 = arith.subf %118, %123 : vector<32x32xf32>
    %125 = arith.mulf %124, %124 : vector<32x32xf32>
    %cst_41 = arith.constant dense<0.000000e+00> : vector<32xf32>
    %126 = vector.multi_reduction <add>, %125, %cst_41 [1] : vector<32x32xf32> to vector<32xf32>
    %127 = vector.shape_cast %126 : vector<32xf32> to vector<32x1xf32>
    %cst_42 = arith.constant 3.125000e-02 : f32
    %128 = vector.broadcast %cst_42 : f32 to vector<32x1xf32>
    %129 = arith.mulf %127, %128 : vector<32x1xf32>
    %cst_43 = arith.constant 9.99999974E-6 : f32
    %130 = vector.broadcast %cst_43 : f32 to vector<32x1xf32>
    %131 = arith.addf %129, %130 : vector<32x1xf32>
    %132 = math.rsqrt %131 : vector<32x1xf32>
    %133 = vector.broadcast %132 : vector<32x1xf32> to vector<32x32xf32>
    %134 = arith.mulf %124, %133 : vector<32x32xf32>
    %135 = vector.broadcast %113 : vector<1x32xf32> to vector<32x32xf32>
    %136 = arith.mulf %134, %135 : vector<32x32xf32>
    %137 = vector.broadcast %114 : vector<1x32xf32> to vector<32x32xf32>
    %138 = arith.addf %136, %137 : vector<32x32xf32>
    %139 = arith.truncf %138 : vector<32x32xf32> to vector<32x32xbf16>
    %c0_44 = arith.constant 0 : index
    %c0_45 = arith.constant 0 : index
    %140 = vector.load %arg5[%c0_44, %c0_45] : memref<32x128xbf16, #tpu.memory_space<vmem>>, vector<32x128xbf16>
    %cst_46 = arith.constant dense<0.000000e+00> : vector<32x128xf32>
    %141 = tpu.matmul %139, %140, %cst_46 {dimension_numbers = #tpu.dot_dimension_numbers<[1], [0], [0], [1], [0, 0, 1, 1], [], []>} : vector<32x32xbf16>, vector<32x128xbf16>, vector<32x128xf32> -> vector<32x128xf32>
    %c0_47 = arith.constant 0 : index
    %c0_48 = arith.constant 0 : index
    %142 = vector.load %arg6[%c0_47, %c0_48] : memref<1x128xf32, #tpu.memory_space<vmem>>, vector<1x128xf32>
    %143 = vector.broadcast %142 : vector<1x128xf32> to vector<32x128xf32>
    %144 = arith.addf %141, %143 : vector<32x128xf32>
    %145 = vector.broadcast %0 : vector<32x1xf32> to vector<32x128xf32>
    %146 = arith.mulf %144, %145 : vector<32x128xf32>
    %147 = arith.truncf %146 : vector<32x128xf32> to vector<32x128xbf16>
    %c0_49 = arith.constant 0 : index
    %c0_50 = arith.constant 0 : index
    %148 = vector.load %arg7[%c0_49, %c0_50] : memref<32x128xbf16, #tpu.memory_space<vmem>>, vector<32x128xbf16>
    tpu.vector_store %arg7[%c0_49, %c0_50], %147 {strides = array<i32>} : memref<32x128xbf16, #tpu.memory_space<vmem>>, vector<32x128xbf16>,
    return
  }
  func.func @transform_0(%arg0: i32) -> (i32, i32) {
    %c0_i32 = arith.constant 0 : i32
    %c0_i32_0 = arith.constant 0 : i32
    return %arg0, %c0_i32 : i32, i32
  }
  func.func @transform_1(%arg0: i32) -> (i32, i32) {
    %c0_i32 = arith.constant 0 : i32
    %c0_i32_0 = arith.constant 0 : i32
    return %arg0, %c0_i32 : i32, i32
  }
  func.func @transform_2(%arg0: i32) -> (i32, i32, i32) {
    %c0_i32 = arith.constant 0 : i32
    %c0_i32_0 = arith.constant 0 : i32
    %c0_i32_1 = arith.constant 0 : i32
    %c0_i32_2 = arith.constant 0 : i32
    return %c0_i32, %c0_i32_0, %c0_i32_1 : i32, i32, i32
  }
  func.func @transform_3(%arg0: i32) -> (i32, i32) {
    %c0_i32 = arith.constant 0 : i32
    %c0_i32_0 = arith.constant 0 : i32
    %c0_i32_1 = arith.constant 0 : i32
    return %c0_i32, %c0_i32_0 : i32, i32
  }
  func.func @transform_4(%arg0: i32) -> (i32, i32) {
    %c0_i32 = arith.constant 0 : i32
    %c0_i32_0 = arith.constant 0 : i32
    %c0_i32_1 = arith.constant 0 : i32
    return %c0_i32, %c0_i32_0 : i32, i32
  }
  func.func @transform_5(%arg0: i32) -> (i32, i32) {
    %c0_i32 = arith.constant 0 : i32
    %c0_i32_0 = arith.constant 0 : i32
    %c0_i32_1 = arith.constant 0 : i32
    return %c0_i32, %c0_i32_0 : i32, i32
  }
  func.func @transform_6(%arg0: i32) -> (i32, i32) {
    %c0_i32 = arith.constant 0 : i32
    %c0_i32_0 = arith.constant 0 : i32
    return %arg0, %c0_i32 : i32, i32
  }
}

</mosaic_0001>

<llo_original>
// kernel: tpu_custom_call.1
$region0: #{tpu_custom_call.1}
  #allocation0 [shape = 'u32[]', space=smem, size = 0x4, offset = 0x4, fixed_abs, tag = 'smem constant byte address 0x4 - core index']
  #allocation1 [shape = 'u32[72,128]{1,0:T(1,128)}', space=vmem, size = 0x9000, scoped, tag = 'internal scratch']
  %s0 = inlined_call_operand.vmem [shape: bf16[32,32], index: 0, kind: input, shape index: {}]
  %s1 = inlined_call_operand.vmem [shape: f32[32,1], index: 1, kind: input, shape index: {}]
  %s2 = inlined_call_operand.vmem [shape: bf16[2,96,32], index: 2, kind: input, shape index: {}]
  %s3 = inlined_call_operand.vmem [shape: f32[6,32], index: 3, kind: input, shape index: {}]
  %s4 = inlined_call_operand.vmem [shape: bf16[32,128], index: 4, kind: input, shape index: {}]
  %s5 = inlined_call_operand.vmem [shape: f32[1,128], index: 5, kind: input, shape index: {}]
  %s6 = inlined_call_operand.hbm [shape: bf16[32,128], index: 6, kind: output, shape index: {}]
  %s7 = sld [smem:[#allocation0]]
  $region34: #{tpu_custom_call.1} parent=0
    _
  %s9 = ssub.s32 1, %s7
  %s10 = scalar_select 0, %s9, %s7
  $region1: #{tpu_custom_call.1} parent=0
    #allocation2 [shape = 'u8[8192]{0}', space=vmem, size = 0x2000, scoped, tag = 'output window, operand 0, single buffered']
    #allocation3 [shape = 's32[1]{0}', space=sflag, size = 0x4, scoped, tag = 'scoped memory for tpu_custom_call.1']
    %11 = vsyncpa [#allocation3], 0
    // Predicated region
    $region2: #{tpu_custom_call.1} parent=1 // pred_check
      _
    $region3: #{tpu_custom_call.1} parent=1 // pred_check_branch
      %13 = sbr.rel (0) target = $region5
    $region4: #{tpu_custom_call.1} parent=1 // pred_region
      _
    $region5: #{tpu_custom_call.1} parent=1 // pred_fallthru
      _
    // Predicated region
    $region6: #{tpu_custom_call.1} parent=1 // pred_check
      _
    $region7: #{tpu_custom_call.1} parent=1 // pred_check_branch
      %15 = sbr.rel (0) target = $region9
    $region8: #{tpu_custom_call.1} parent=1 // pred_region
      _
    $region9: #{tpu_custom_call.1} parent=1 // pred_fallthru
      _
    // Predicated region
    $region10: #{tpu_custom_call.1} parent=1 // pred_check
      _
    $region11: #{tpu_custom_call.1} parent=1 // pred_check_branch
      %17 = sbr.rel (0) target = $region13
    $region12: #{tpu_custom_call.1} parent=1 // pred_region
      _
    $region13: #{tpu_custom_call.1} parent=1 // pred_fallthru
      _
    // Predicated region
    $region14: #{tpu_custom_call.1} parent=1 // pred_check
      _
    $region15: #{tpu_custom_call.1} parent=1 // pred_check_branch
      %19 = sbr.rel (0) target = $region17
    $region16: #{tpu_custom_call.1} parent=1 // pred_region
      _
    $region17: #{tpu_custom_call.1} parent=1 // pred_fallthru
      _
    // Predicated region
    $region18: #{tpu_custom_call.1} parent=1 // pred_check
      _
    $region19: #{tpu_custom_call.1} parent=1 // pred_check_branch
      %21 = sbr.rel (0) target = $region21
    $region20: #{tpu_custom_call.1} parent=1 // pred_region
      _
    $region21: #{tpu_custom_call.1} parent=1 // pred_fallthru
      _
    // Predicated region
    $region22: #{tpu_custom_call.1} parent=1 // pred_check
      _
    $region23: #{tpu_custom_call.1} parent=1 // pred_check_branch
      %23 = sbr.rel (0) target = $region25
    $region24: #{tpu_custom_call.1} parent=1 // pred_region
      _
    $region25: #{tpu_custom_call.1} parent=1 // pred_fallthru
      _
    %v25 = vld [vmem:[%s1] sm:$0xff]
    %v26 = vld [vmem:[%s1 + $0x8] sm:$0xff]
    %v27 = vld [vmem:[%s1 + $0x10] sm:$0xff]
    %v28 = vld [vmem:[%s1 + $0x18] sm:$0xff]
    %v29 = vld [vmem:[%s3] sm:$0x3f]
    %v30 = vlaneseq
    %v31 = vshrl.u32 %v30, 7
    %v32 = vadd.s32 %v31, 8
    %v33 = vadd.s32 %v31, 16
    %v34 = vadd.s32 %v31, 24
    %vm35 = vcmp.lt.s32.totalorder %v31, 0
    %v36 = vsub.s32 0, %v31
    %v37 = vsel %vm35, %v36, %v31
    %v38 = vshrl.u32 %v37, 4
    %v39 = vand.u32 %v37, 15
    %v40 = vsub.s32 0, %v39
    %v41 = vsel %vm35, %v40, %v39
    %vm42 = vcmp.lt.s32.totalorder %v32, 0
    %v43 = vsub.s32 0, %v32
    %v44 = vsel %vm42, %v43, %v32
    %v45 = vshrl.u32 %v44, 4
    %v46 = vand.u32 %v44, 15
    %v47 = vsub.s32 0, %v46
    %v48 = vsel %vm42, %v47, %v46
    %vm49 = vcmp.lt.s32.totalorder %v33, 0
    %v50 = vsub.s32 0, %v33
    %v51 = vsel %vm49, %v50, %v33
    %v52 = vshrl.u32 %v51, 4
    %v53 = vand.u32 %v51, 15
    %v54 = vsub.s32 0, %v53
    %v55 = vsel %vm49, %v54, %v53
    %vm56 = vcmp.lt.s32.totalorder %v34, 0
    %v57 = vsub.s32 0, %v34
    %v58 = vsel %vm56, %v57, %v34
    %v59 = vshrl.u32 %v58, 4
    %v60 = vand.u32 %v58, 15
    %v61 = vsub.s32 0, %v60
    %v62 = vsel %vm56, %v61, %v60
    %vm63 = vcmp.ne.s32.totalorder %v41, 0
    %vm64 = vcmp.ne.s32.totalorder %v48, 0
    %vm65 = vcmp.ne.s32.totalorder %v55, 0
    %vm66 = vcmp.ne.s32.totalorder %v62, 0
    %vm67 = vcmp.lt.s32.totalorder %v41, 0
    %vm68 = vcmp.lt.s32.totalorder %v48, 0
    %vm69 = vcmp.lt.s32.totalorder %v55, 0
    %vm70 = vcmp.lt.s32.totalorder %v62, 0
    %vm71 = vmand %vm67, %vm63
    %vm72 = vmand %vm68, %vm64
    %vm73 = vmand %vm69, %vm65
    %vm74 = vmand %vm70, %vm66
    %v75 = vadd.s32 %v41, 16
    %v76 = vadd.s32 %v48, 16
    %v77 = vadd.s32 %v55, 16
    %v78 = vadd.s32 %v62, 16
    %v79 = vsel %vm71, %v75, %v41
    %v80 = vsel %vm72, %v76, %v48
    %v81 = vsel %vm73, %v77, %v55
    %v82 = vsel %vm74, %v78, %v62
    %v83 = vadd.s32 %v79, 4294967295
    %v84 = vadd.s32 %v80, 4294967295
    %v85 = vadd.s32 %v81, 4294967295
    %v86 = vadd.s32 %v82, 4294967295
    %vm87 = vcmp.ge.s32.totalorder %v83, 0
    %vm88 = vcmp.ge.s32.totalorder %v84, 0
    %vm89 = vcmp.ge.s32.totalorder %v85, 0
    %vm90 = vcmp.ge.s32.totalorder %v86, 0
    %vm91 = vcmp.lt.s32.totalorder %v83, 16
    %vm92 = vcmp.lt.s32.totalorder %v84, 16
    %vm93 = vcmp.lt.s32.totalorder %v85, 16
    %vm94 = vcmp.lt.s32.totalorder %v86, 16
    %vm95 = vmand %vm87, %vm91
    %vm96 = vmand %vm88, %vm92
    %vm97 = vmand %vm89, %vm93
    %vm98 = vmand %vm90, %vm94
    %v99 = vadd.s32 %v79, 1
    %v100 = vadd.s32 %v80, 1
    %v101 = vadd.s32 %v81, 1
    %v102 = vadd.s32 %v82, 1
    %vm103 = vcmp.ge.s32.totalorder %v99, 0
    %vm104 = vcmp.ge.s32.totalorder %v100, 0
    %vm105 = vcmp.ge.s32.totalorder %v101, 0
    %vm106 = vcmp.ge.s32.totalorder %v102, 0
    %vm107 = vcmp.lt.s32.totalorder %v99, 16
    %vm108 = vcmp.lt.s32.totalorder %v100, 16
    %vm109 = vcmp.lt.s32.totalorder %v101, 16
    %vm110 = vcmp.lt.s32.totalorder %v102, 16
    %vm111 = vmand %vm103, %vm107
    %vm112 = vmand %vm104, %vm108
    %vm113 = vmand %vm105, %vm109
    %vm114 = vmand %vm106, %vm110
    %v115 = vld [vmem:[%s0] sm:$0xf]
    %v116 = vld [vmem:[%s0 + $0x4] sm:$0xf]
    %v117 = vld [vmem:[%s0 + $0x8] sm:$0xf]
    %v118 = vld [vmem:[%s0 + $0xc] sm:$0xf]
    %v119 = vunpack.c.l.bf16 %v115
    %v120 = vunpack.c.l.bf16 %v116
    %v121 = vunpack.c.l.bf16 %v117
    %v122 = vunpack.c.l.bf16 %v118
    %v123 = vld [vmem:[%s2] sm:$0xf]
    %v124 = vld [vmem:[%s2 + $0x4] sm:$0xf]
    %v125 = vld [vmem:[%s2 + $0x8] sm:$0xf]
    %v126 = vld [vmem:[%s2 + $0xc] sm:$0xf]
    %v127 = vld [vmem:[%s2 + $0x10] sm:$0xf]
    %v128 = vld [vmem:[%s2 + $0x14] sm:$0xf]
    %v129 = vld [vmem:[%s2 + $0x18] sm:$0xf]
    %v130 = vld [vmem:[%s2 + $0x1c] sm:$0xf]
    %v131 = vld [vmem:[%s2 + $0x20] sm:$0xf]
    %v132 = vld [vmem:[%s2 + $0x24] sm:$0xf]
    %v133 = vld [vmem:[%s2 + $0x28] sm:$0xf]
    %v134 = vld [vmem:[%s2 + $0x2c] sm:$0xf]
    %v135 = vrot.slane %v119, 7
    %v136 = vrot.slane %v120, 7
    %v137 = vrot.slane %v121, 7
    %v138 = vrot.slane %v122, 7
    %vm139 = vcmp.lt.s32.totalorder %v31, 1
    %v140 = vsel %vm139, %v137, %v138
    %v141 = vsel %vm139, %v136, %v137
    %v142 = vsel %vm139, %v135, %v136
    %v143 = vsel %vm139, %v138, %v135
    %v144 = vsel %vm95, 1, 0
    %v145 = vsel %vm96, 1, 0
    %v146 = vsel %vm97, 1, 0
    %v147 = vsel %vm98, 1, 0
    %vm148 = vcmp.eq.s32.totalorder %v144, 1
    %vm149 = vcmp.eq.s32.totalorder %v145, 1
    %vm150 = vcmp.eq.s32.totalorder %v146, 1
    %vm151 = vcmp.eq.s32.totalorder %v147, 1
    %v152 = vsel %vm148, %v143, 0.0
    %v153 = vsel %vm149, %v142, 0.0
    %v154 = vsel %vm150, %v141, 0.0
    %v155 = vsel %vm151, %v140, 0.0
    %v156 = vpack.c.bf16 %v153, %v152
    %v157 = vpack.c.bf16 %v155, %v154
    %v162 = vunpack.c.l.b16 %v115
    %v163 = vunpack.c.l.b16 %v116
    %v164 = vunpack.c.l.b16 %v117
    %v165 = vunpack.c.l.b16 %v118
    %v166 = vpack.c.b16 %v163, %v162
    %v167 = vpack.c.b16 %v165, %v164
    %v172 = vunpack.c.l.b16 %v127
    %v173 = vunpack.c.l.b16 %v128
    %v174 = vunpack.c.l.b16 %v129
    %v175 = vunpack.c.l.b16 %v130
    %v176 = vpack.c.b16 %v173, %v172
    %v177 = vpack.c.b16 %v175, %v174
    %vm180 = vcmask 261120
    %v182 = vsel %vm180, %v166, 0
    %v185 = vsel %vm180, %v167, 0
    %187 = vmatpush.bf16.msra.mxu0 0
    %188 = vmatpush.bf16.msra.mxu0 0
    %189 = vmatpush.bf16.msra.mxu0 0
    %190 = vmatpush.bf16.msra.mxu0 0
    %191 = vmatpush.bf16.msra.mxu0 0
    %192 = vmatpush.bf16.msra.mxu0 0
    %193 = vmatpush.bf16.msra.mxu0 %v177
    %194 = vmatpush.bf16.msra.mxu0 %v176
    %195 = vmatmul.bf16.gmra.mxu0 %v182
    %v196 = vpop.f32.mrf.mxu0
    %v197 = vadd.f32 0.0, %v196
    %v198 = vpop.f32.mrf.mxu0
    %v199 = vadd.f32 0.0, %v198
    %200 = vmatmul.bf16.gmra.mxu0 %v185
    %v201 = vpop.f32.mrf.mxu0
    %v202 = vadd.f32 0.0, %v201
    %v203 = vpop.f32.mrf.mxu0
    %v204 = vadd.f32 0.0, %v203
    %205 = vdwg.mxu0
    %v210 = vunpack.c.l.b16 %v123
    %v211 = vunpack.c.l.b16 %v124
    %v212 = vunpack.c.l.b16 %v125
    %v213 = vunpack.c.l.b16 %v126
    %v214 = vpack.c.b16 %v211, %v210
    %v215 = vpack.c.b16 %v213, %v212
    %v219 = vsel %vm180, %v156, 0
    %v222 = vsel %vm180, %v157, 0
    %224 = vmatpush.bf16.msra.mxu0 0
    %225 = vmatpush.bf16.msra.mxu0 0
    %226 = vmatpush.bf16.msra.mxu0 0
    %227 = vmatpush.bf16.msra.mxu0 0
    %228 = vmatpush.bf16.msra.mxu0 0
    %229 = vmatpush.bf16.msra.mxu0 0
    %230 = vmatpush.bf16.msra.mxu0 %v215
    %231 = vmatpush.bf16.msra.mxu0 %v214
    %232 = vmatmul.bf16.gmra.mxu0 %v219
    %v233 = vpop.f32.mrf.mxu0
    %v234 = vadd.f32 %v197, %v233
    %v235 = vpop.f32.mrf.mxu0
    %v236 = vadd.f32 %v199, %v235
    %237 = vmatmul.bf16.gmra.mxu0 %v222
    %v238 = vpop.f32.mrf.mxu0
    %v239 = vadd.f32 %v202, %v238
    %v240 = vpop.f32.mrf.mxu0
    %v241 = vadd.f32 %v204, %v240
    %242 = vdwg.mxu0
    %v243 = vrot.slane %v119, 1
    %v244 = vrot.slane %v120, 1
    %v245 = vrot.slane %v121, 1
    %v246 = vrot.slane %v122, 1
    %vm247 = vcmp.lt.s32.totalorder %v31, 7
    %v248 = vsel %vm247, %v245, %v246
    %v249 = vsel %vm247, %v244, %v245
    %v250 = vsel %vm247, %v243, %v244
    %v251 = vsel %vm247, %v246, %v243
    %v252 = vsel %vm111, 1, 0
    %v253 = vsel %vm112, 1, 0
    %v254 = vsel %vm113, 1, 0
    %v255 = vsel %vm114, 1, 0
    %vm256 = vcmp.eq.s32.totalorder %v252, 1
    %vm257 = vcmp.eq.s32.totalorder %v253, 1
    %vm258 = vcmp.eq.s32.totalorder %v254, 1
    %vm259 = vcmp.eq.s32.totalorder %v255, 1
    %v260 = vsel %vm256, %v250, 0.0
    %v261 = vsel %vm257, %v249, 0.0
    %v262 = vsel %vm258, %v248, 0.0
    %v263 = vsel %vm259, %v251, 0.0
    %v264 = vpack.c.bf16 %v261, %v260
    %v265 = vpack.c.bf16 %v263, %v262
    %v270 = vunpack.c.l.b16 %v131
    %v271 = vunpack.c.l.b16 %v132
    %v272 = vunpack.c.l.b16 %v133
    %v273 = vunpack.c.l.b16 %v134
    %v274 = vpack.c.b16 %v271, %v270
    %v275 = vpack.c.b16 %v273, %v272
    %v279 = vsel %vm180, %v264, 0
    %v282 = vsel %vm180, %v265, 0
    %284 = vmatpush.bf16.msra.mxu0 0
    %285 = vmatpush.bf16.msra.mxu0 0
    %286 = vmatpush.bf16.msra.mxu0 0
    %287 = vmatpush.bf16.msra.mxu0 0
    %288 = vmatpush.bf16.msra.mxu0 0
    %289 = vmatpush.bf16.msra.mxu0 0
    %290 = vmatpush.bf16.msra.mxu0 %v275
    %291 = vmatpush.bf16.msra.mxu0 %v274
    %292 = vmatmul.bf16.gmra.mxu0 %v279
    %v293 = vpop.f32.mrf.mxu0
    %v294 = vadd.f32 0.0, %v293
    %v295 = vpop.f32.mrf.mxu0
    %v296 = vadd.f32 0.0, %v295
    %297 = vmatmul.bf16.gmra.mxu0 %v282
    %v298 = vpop.f32.mrf.mxu0
    %v299 = vadd.f32 0.0, %v298
    %v300 = vpop.f32.mrf.mxu0
    %v301 = vadd.f32 0.0, %v300
    %302 = vdwg.mxu0
    %v303 = vadd.f32 %v234, %v294
    %v304 = vadd.f32 %v236, %v296
    %v305 = vadd.f32 %v239, %v299
    %v306 = vadd.f32 %v241, %v301
    %v307 = vperm.slane %v29, 0
    %v308 = vadd.f32 %v303, %v307
    %v309 = vadd.f32 %v304, %v307
    %v310 = vadd.f32 %v305, %v307
    %v311 = vadd.f32 %v306, %v307
    %v312 = vmax.f32 %v308, 0.0
    %v313 = vmax.f32 %v309, 0.0
    %v314 = vmax.f32 %v310, 0.0
    %v315 = vmax.f32 %v311, 0.0
    %v316 = vsel %vm180, %v312, 0.0
    %317 = vadd.xlane.f32.xlu0 %v316
    %v318 = vpop.xlane.xlu0 %317
    %v319 = vsel %vm180, %v313, 0.0
    %320 = vadd.xlane.f32.xlu0 %v319
    %v321 = vpop.xlane.xlu0 %320
    %v322 = vsel %vm180, %v314, 0.0
    %323 = vadd.xlane.f32.xlu0 %v322
    %v324 = vpop.xlane.xlu0 %323
    %v325 = vsel %vm180, %v315, 0.0
    %326 = vadd.xlane.f32.xlu0 %v325
    %v327 = vpop.xlane.xlu0 %326
    %v328 = vmul.f32 %v318, 0.03125
    %v329 = vmul.f32 %v321, 0.03125
    %v330 = vmul.f32 %v324, 0.03125
    %v331 = vmul.f32 %v327, 0.03125
    %v332 = vsub.f32 %v312, %v328
    %v333 = vsub.f32 %v313, %v329
    %v334 = vsub.f32 %v314, %v330
    %v335 = vsub.f32 %v315, %v331
    %v336 = vmul.f32 %v332, %v332
    %v337 = vmul.f32 %v333, %v333
    %v338 = vmul.f32 %v334, %v334
    %v339 = vmul.f32 %v335, %v335
    %v340 = vsel %vm180, %v336, 0.0
    %341 = vadd.xlane.f32.xlu0 %v340
    %v342 = vpop.xlane.xlu0 %341
    %v343 = vsel %vm180, %v337, 0.0
    %344 = vadd.xlane.f32.xlu0 %v343
    %v345 = vpop.xlane.xlu0 %344
    %v346 = vsel %vm180, %v338, 0.0
    %347 = vadd.xlane.f32.xlu0 %v346
    %v348 = vpop.xlane.xlu0 %347
    %v349 = vsel %vm180, %v339, 0.0
    %350 = vadd.xlane.f32.xlu0 %v349
    %v351 = vpop.xlane.xlu0 %350
    %v352 = vmul.f32 %v342, 0.03125
    %v353 = vmul.f32 %v345, 0.03125
    %v354 = vmul.f32 %v348, 0.03125
    %v355 = vmul.f32 %v351, 0.03125
    %v356 = vadd.f32 %v352, 1e-05
    %v357 = vadd.f32 %v353, 1e-05
    %v358 = vadd.f32 %v354, 1e-05
    %v359 = vadd.f32 %v355, 1e-05
    %v360 = vrsqrt.pop %v356
    %v361 = vmul.f32 %v360, %v356
    %v362 = vmul.f32 %v361, %v360
    %v363 = vmul.f32 0.5, %v362
    %v364 = vsub.f32 1.5, %v363
    %v365 = vmul.f32 %v360, %v364
    %vm366 = vweird.f32 %v356
    %vm367 = vweird.f32 %v360
    %vm368 = vmor %vm366, %vm367
    %v369 = vsel %vm368, %v360, %v365
    %v370 = vrsqrt.pop %v357
    %v371 = vmul.f32 %v370, %v357
    %v372 = vmul.f32 %v371, %v370
    %v373 = vmul.f32 0.5, %v372
    %v374 = vsub.f32 1.5, %v373
    %v375 = vmul.f32 %v370, %v374
    %vm376 = vweird.f32 %v357
    %vm377 = vweird.f32 %v370
    %vm378 = vmor %vm376, %vm377
    %v379 = vsel %vm378, %v370, %v375
    %v380 = vrsqrt.pop %v358
    %v381 = vmul.f32 %v380, %v358
    %v382 = vmul.f32 %v381, %v380
    %v383 = vmul.f32 0.5, %v382
    %v384 = vsub.f32 1.5, %v383
    %v385 = vmul.f32 %v380, %v384
    %vm386 = vweird.f32 %v358
    %vm387 = vweird.f32 %v380
    %vm388 = vmor %vm386, %vm387
    %v389 = vsel %vm388, %v380, %v385
    %v390 = vrsqrt.pop %v359
    %v391 = vmul.f32 %v390, %v359
    %v392 = vmul.f32 %v391, %v390
    %v393 = vmul.f32 0.5, %v392
    %v394 = vsub.f32 1.5, %v393
    %v395 = vmul.f32 %v390, %v394
    %vm396 = vweird.f32 %v359
    %vm397 = vweird.f32 %v390
    %vm398 = vmor %vm396, %vm397
    %v399 = vsel %vm398, %v390, %v395
    %v400 = vmul.f32 %v332, %v369
    %v401 = vmul.f32 %v333, %v379
    %v402 = vmul.f32 %v334, %v389
    %v403 = vmul.f32 %v335, %v399
    %v404 = vperm.slane %v29, 1
    %v405 = vmul.f32 %v400, %v404
    %v406 = vmul.f32 %v401, %v404
    %v407 = vmul.f32 %v402, %v404
    %v408 = vmul.f32 %v403, %v404
    %v409 = vperm.slane %v29, 2
    %v410 = vadd.f32 %v405, %v409
    %v411 = vadd.f32 %v406, %v409
    %v412 = vadd.f32 %v407, %v409
    %v413 = vadd.f32 %v408, %v409
    %s414 = scalar_lea.vmem %s2, 48
    %v415 = vld [vmem:[%s414] sm:$0xf]
    %v416 = vld [vmem:[%s414 + $0x4] sm:$0xf]
    %v417 = vld [vmem:[%s414 + $0x8] sm:$0xf]
    %v418 = vld [vmem:[%s414 + $0xc] sm:$0xf]
    %v419 = vld [vmem:[%s414 + $0x10] sm:$0xf]
    %v420 = vld [vmem:[%s414 + $0x14] sm:$0xf]
    %v421 = vld [vmem:[%s414 + $0x18] sm:$0xf]
    %v422 = vld [vmem:[%s414 + $0x1c] sm:$0xf]
    %v423 = vld [vmem:[%s414 + $0x20] sm:$0xf]
    %v424 = vld [vmem:[%s414 + $0x24] sm:$0xf]
    %v425 = vld [vmem:[%s414 + $0x28] sm:$0xf]
    %v426 = vld [vmem:[%s414 + $0x2c] sm:$0xf]
    %v427 = vrot.slane %v410, 7
    %v428 = vrot.slane %v411, 7
    %v429 = vrot.slane %v412, 7
    %v430 = vrot.slane %v413, 7
    %v431 = vsel %vm139, %v429, %v430
    %v432 = vsel %vm139, %v428, %v429
    %v433 = vsel %vm139, %v427, %v428
    %v434 = vsel %vm139, %v430, %v427
    %v435 = vsel %vm148, %v434, 0.0
    %v436 = vsel %vm149, %v433, 0.0
    %v437 = vsel %vm150, %v432, 0.0
    %v438 = vsel %vm151, %v431, 0.0
    %v439 = vpack.c.bf16 %v436, %v435
    %v440 = vpack.c.bf16 %v438, %v437
    %v441 = vpack.c.bf16 %v411, %v410
    %v442 = vpack.c.bf16 %v413, %v412
    %v447 = vunpack.c.l.b16 %v419
    %v448 = vunpack.c.l.b16 %v420
    %v449 = vunpack.c.l.b16 %v421
    %v450 = vunpack.c.l.b16 %v422
    %v451 = vpack.c.b16 %v448, %v447
    %v452 = vpack.c.b16 %v450, %v449
    %v456 = vsel %vm180, %v441, 0
    %v459 = vsel %vm180, %v442, 0
    %461 = vmatpush.bf16.msra.mxu0 0
    %462 = vmatpush.bf16.msra.mxu0 0
    %463 = vmatpush.bf16.msra.mxu0 0
    %464 = vmatpush.bf16.msra.mxu0 0
    %465 = vmatpush.bf16.msra.mxu0 0
    %466 = vmatpush.bf16.msra.mxu0 0
    %467 = vmatpush.bf16.msra.mxu0 %v452
    %468 = vmatpush.bf16.msra.mxu0 %v451
    %469 = vmatmul.bf16.gmra.mxu0 %v456
    %v470 = vpop.f32.mrf.mxu0
    %v471 = vadd.f32 0.0, %v470
    %v472 = vpop.f32.mrf.mxu0
    %v473 = vadd.f32 0.0, %v472
    %474 = vmatmul.bf16.gmra.mxu0 %v459
    %v475 = vpop.f32.mrf.mxu0
    %v476 = vadd.f32 0.0, %v475
    %v477 = vpop.f32.mrf.mxu0
    %v478 = vadd.f32 0.0, %v477
    %479 = vdwg.mxu0
    %v484 = vunpack.c.l.b16 %v415
    %v485 = vunpack.c.l.b16 %v416
    %v486 = vunpack.c.l.b16 %v417
    %v487 = vunpack.c.l.b16 %v418
    %v488 = vpack.c.b16 %v485, %v484
    %v489 = vpack.c.b16 %v487, %v486
    %v493 = vsel %vm180, %v439, 0
    %v496 = vsel %vm180, %v440, 0
    %498 = vmatpush.bf16.msra.mxu0 0
    %499 = vmatpush.bf16.msra.mxu0 0
    %500 = vmatpush.bf16.msra.mxu0 0
    %501 = vmatpush.bf16.msra.mxu0 0
    %502 = vmatpush.bf16.msra.mxu0 0
    %503 = vmatpush.bf16.msra.mxu0 0
    %504 = vmatpush.bf16.msra.mxu0 %v489
    %505 = vmatpush.bf16.msra.mxu0 %v488
    %506 = vmatmul.bf16.gmra.mxu0 %v493
    %v507 = vpop.f32.mrf.mxu0
    %v508 = vadd.f32 %v471, %v507
    %v509 = vpop.f32.mrf.mxu0
    %v510 = vadd.f32 %v473, %v509
    %511 = vmatmul.bf16.gmra.mxu0 %v496
    %v512 = vpop.f32.mrf.mxu0
    %v513 = vadd.f32 %v476, %v512
    %v514 = vpop.f32.mrf.mxu0
    %v515 = vadd.f32 %v478, %v514
    %516 = vdwg.mxu0
    %v517 = vrot.slane %v410, 1
    %v518 = vrot.slane %v411, 1
    %v519 = vrot.slane %v412, 1
    %v520 = vrot.slane %v413, 1
    %v521 = vsel %vm247, %v519, %v520
    %v522 = vsel %vm247, %v518, %v519
    %v523 = vsel %vm247, %v517, %v518
    %v524 = vsel %vm247, %v520, %v517
    %v525 = vsel %vm256, %v523, 0.0
    %v526 = vsel %vm257, %v522, 0.0
    %v527 = vsel %vm258, %v521, 0.0
    %v528 = vsel %vm259, %v524, 0.0
    %v529 = vpack.c.bf16 %v526, %v525
    %v530 = vpack.c.bf16 %v528, %v527
    %v535 = vunpack.c.l.b16 %v423
    %v536 = vunpack.c.l.b16 %v424
    %v537 = vunpack.c.l.b16 %v425
    %v538 = vunpack.c.l.b16 %v426
    %v539 = vpack.c.b16 %v536, %v535
    %v540 = vpack.c.b16 %v538, %v537
    %v544 = vsel %vm180, %v529, 0
    %v547 = vsel %vm180, %v530, 0
    %549 = vmatpush.bf16.msra.mxu0 0
    %550 = vmatpush.bf16.msra.mxu0 0
    %551 = vmatpush.bf16.msra.mxu0 0
    %552 = vmatpush.bf16.msra.mxu0 0
    %553 = vmatpush.bf16.msra.mxu0 0
    %554 = vmatpush.bf16.msra.mxu0 0
    %555 = vmatpush.bf16.msra.mxu0 %v540
    %556 = vmatpush.bf16.msra.mxu0 %v539
    %557 = vmatmul.bf16.gmra.mxu0 %v544
    %v558 = vpop.f32.mrf.mxu0
    %v559 = vadd.f32 0.0, %v558
    %v560 = vpop.f32.mrf.mxu0
    %v561 = vadd.f32 0.0, %v560
    %562 = vmatmul.bf16.gmra.mxu0 %v547
    %v563 = vpop.f32.mrf.mxu0
    %v564 = vadd.f32 0.0, %v563
    %v565 = vpop.f32.mrf.mxu0
    %v566 = vadd.f32 0.0, %v565
    %567 = vdwg.mxu0
    %v568 = vadd.f32 %v508, %v559
    %v569 = vadd.f32 %v510, %v561
    %v570 = vadd.f32 %v513, %v564
    %v571 = vadd.f32 %v515, %v566
    %v572 = vperm.slane %v29, 3
    %v573 = vadd.f32 %v568, %v572
    %v574 = vadd.f32 %v569, %v572
    %v575 = vadd.f32 %v570, %v572
    %v576 = vadd.f32 %v571, %v572
    %v577 = vmax.f32 %v573, 0.0
    %v578 = vmax.f32 %v574, 0.0
    %v579 = vmax.f32 %v575, 0.0
    %v580 = vmax.f32 %v576, 0.0
    %v581 = vsel %vm180, %v577, 0.0
    %582 = vadd.xlane.f32.xlu0 %v581
    %v583 = vpop.xlane.xlu0 %582
    %v584 = vsel %vm180, %v578, 0.0
    %585 = vadd.xlane.f32.xlu0 %v584
    %v586 = vpop.xlane.xlu0 %585
    %v587 = vsel %vm180, %v579, 0.0
    %588 = vadd.xlane.f32.xlu0 %v587
    %v589 = vpop.xlane.xlu0 %588
    %v590 = vsel %vm180, %v580, 0.0
    %591 = vadd.xlane.f32.xlu0 %v590
    %v592 = vpop.xlane.xlu0 %591
    %v593 = vmul.f32 %v583, 0.03125
    %v594 = vmul.f32 %v586, 0.03125
    %v595 = vmul.f32 %v589, 0.03125
    %v596 = vmul.f32 %v592, 0.03125
    %v597 = vsub.f32 %v577, %v593
    %v598 = vsub.f32 %v578, %v594
    %v599 = vsub.f32 %v579, %v595
    %v600 = vsub.f32 %v580, %v596
    %v601 = vmul.f32 %v597, %v597
    %v602 = vmul.f32 %v598, %v598
    %v603 = vmul.f32 %v599, %v599
    %v604 = vmul.f32 %v600, %v600
    %v605 = vsel %vm180, %v601, 0.0
    %606 = vadd.xlane.f32.xlu0 %v605
    %v607 = vpop.xlane.xlu0 %606
    %v608 = vsel %vm180, %v602, 0.0
    %609 = vadd.xlane.f32.xlu0 %v608
    %v610 = vpop.xlane.xlu0 %609
    %v611 = vsel %vm180, %v603, 0.0
    %612 = vadd.xlane.f32.xlu0 %v611
    %v613 = vpop.xlane.xlu0 %612
    %v614 = vsel %vm180, %v604, 0.0
    %615 = vadd.xlane.f32.xlu0 %v614
    %v616 = vpop.xlane.xlu0 %615
    %v617 = vmul.f32 %v607, 0.03125
    %v618 = vmul.f32 %v610, 0.03125
    %v619 = vmul.f32 %v613, 0.03125
    %v620 = vmul.f32 %v616, 0.03125
    %v621 = vadd.f32 %v617, 1e-05
    %v622 = vadd.f32 %v618, 1e-05
    %v623 = vadd.f32 %v619, 1e-05
    %v624 = vadd.f32 %v620, 1e-05
    %v625 = vrsqrt.pop %v621
    %v626 = vmul.f32 %v625, %v621
    %v627 = vmul.f32 %v626, %v625
    %v628 = vmul.f32 0.5, %v627
    %v629 = vsub.f32 1.5, %v628
    %v630 = vmul.f32 %v625, %v629
    %vm631 = vweird.f32 %v621
    %vm632 = vweird.f32 %v625
    %vm633 = vmor %vm631, %vm632
    %v634 = vsel %vm633, %v625, %v630
    %v635 = vrsqrt.pop %v622
    %v636 = vmul.f32 %v635, %v622
    %v637 = vmul.f32 %v636, %v635
    %v638 = vmul.f32 0.5, %v637
    %v639 = vsub.f32 1.5, %v638
    %v640 = vmul.f32 %v635, %v639
    %vm641 = vweird.f32 %v622
    %vm642 = vweird.f32 %v635
    %vm643 = vmor %vm641, %vm642
    %v644 = vsel %vm643, %v635, %v640
    %v645 = vrsqrt.pop %v623
    %v646 = vmul.f32 %v645, %v623
    %v647 = vmul.f32 %v646, %v645
    %v648 = vmul.f32 0.5, %v647
    %v649 = vsub.f32 1.5, %v648
    %v650 = vmul.f32 %v645, %v649
    %vm651 = vweird.f32 %v623
    %vm652 = vweird.f32 %v645
    %vm653 = vmor %vm651, %vm652
    %v654 = vsel %vm653, %v645, %v650
    %v655 = vrsqrt.pop %v624
    %v656 = vmul.f32 %v655, %v624
    %v657 = vmul.f32 %v656, %v655
    %v658 = vmul.f32 0.5, %v657
    %v659 = vsub.f32 1.5, %v658
    %v660 = vmul.f32 %v655, %v659
    %vm661 = vweird.f32 %v624
    %vm662 = vweird.f32 %v655
    %vm663 = vmor %vm661, %vm662
    %v664 = vsel %vm663, %v655, %v660
    %v665 = vmul.f32 %v597, %v634
    %v666 = vmul.f32 %v598, %v644
    %v667 = vmul.f32 %v599, %v654
    %v668 = vmul.f32 %v600, %v664
    %v669 = vperm.slane %v29, 4
    %v670 = vmul.f32 %v665, %v669
    %v671 = vmul.f32 %v666, %v669
    %v672 = vmul.f32 %v667, %v669
    %v673 = vmul.f32 %v668, %v669
    %v674 = vperm.slane %v29, 5
    %v675 = vadd.f32 %v670, %v674
    %v676 = vadd.f32 %v671, %v674
    %v677 = vadd.f32 %v672, %v674
    %v678 = vadd.f32 %v673, %v674
    %v679 = vpack.c.bf16 %v676, %v675
    %v680 = vpack.c.bf16 %v678, %v677
    %v681 = vld [vmem:[%s4] sm:$0xf]
    %v682 = vld [vmem:[%s4 + $0x4] sm:$0xf]
    %v683 = vld [vmem:[%s4 + $0x8] sm:$0xf]
    %v684 = vld [vmem:[%s4 + $0xc] sm:$0xf]
    %v685 = vld [vmem:[%s5] sm:$0x1]
    %v687 = vperm.slane %v685, 0
    %v693 = vunpack.c.l.b16 %v681
    %v694 = vunpack.c.l.b16 %v682
    %v695 = vunpack.c.l.b16 %v683
    %v696 = vunpack.c.l.b16 %v684
    %v697 = vpack.c.b16 %v694, %v693
    %v698 = vpack.c.b16 %v696, %v695
    %v702 = vsel %vm180, %v679, 0
    %v705 = vsel %vm180, %v680, 0
    %707 = vmatpush.bf16.msra.mxu0 0
    %708 = vmatpush.bf16.msra.mxu0 0
    %709 = vmatpush.bf16.msra.mxu0 0
    %710 = vmatpush.bf16.msra.mxu0 0
    %711 = vmatpush.bf16.msra.mxu0 0
    %712 = vmatpush.bf16.msra.mxu0 0
    %713 = vmatpush.bf16.msra.mxu0 %v698
    %714 = vmatpush.bf16.msra.mxu0 %v697
    %715 = vmatmul.bf16.gmra.mxu0 %v702
    %v716 = vpop.f32.mrf.mxu0
    %v717 = vadd.f32 %v687, %v716
    %v718 = vpop.f32.mrf.mxu0
    %v719 = vadd.f32 %v687, %v718
    %720 = vmatmul.bf16.gmra.mxu0 %v705
    %v721 = vpop.f32.mrf.mxu0
    %v722 = vadd.f32 %v687, %v721
    %v723 = vpop.f32.mrf.mxu0
    %v724 = vadd.f32 %v687, %v723
    %725 = vdwg.mxu0
    %727 = vset.pattern.permute.xlu0 0
    %728 = vperm.xlu0 %727, %v25
    %v729 = vpop.permute.xlu0 %728
    %732 = vset.pattern.permute.xlu0 0
    %733 = vperm.xlu0 %732, %v26
    %v734 = vpop.permute.xlu0 %733
    %737 = vset.pattern.permute.xlu0 0
    %738 = vperm.xlu0 %737, %v27
    %v739 = vpop.permute.xlu0 %738
    %742 = vset.pattern.permute.xlu0 0
    %743 = vperm.xlu0 %742, %v28
    %v744 = vpop.permute.xlu0 %743
    %v746 = vmul.f32 %v717, %v729
    %v747 = vmul.f32 %v719, %v734
    %v748 = vmul.f32 %v722, %v739
    %v749 = vmul.f32 %v724, %v744
    %v750 = vpack.c.bf16 %v746, %v746
    %v751 = vpack.c.bf16 %v747, %v747
    %v752 = vpack.c.bf16 %v748, %v748
    %v753 = vpack.c.bf16 %v749, %v749
    %754 = vst [vmem:[#allocation2] sm:$0xf] %v750
    %755 = vst [vmem:[#allocation2 + $0x4] sm:$0xf] %v751
    %756 = vst [vmem:[#allocation2 + $0x8] sm:$0xf] %v752
    %757 = vst [vmem:[#allocation2 + $0xc] sm:$0xf] %v753
    // Predicated region
    $region26: #{tpu_custom_call.1} parent=1 // pred_check
      _
    $region27: #{tpu_custom_call.1} parent=1 // pred_check_branch
      %759 = sbr.rel (0) target = $region29
    $region28: #{tpu_custom_call.1} parent=1 // pred_region
      %761 = vsyncadd [#allocation3], 0
      %s762 = sshll.u32 [#allocation2], 4
      %s763 = int_to_ptr.vmem [resolvable:$true] %s762
      %s764 = sshll.u32 %s6, 4
      %s765 = int_to_ptr.hbm [resolvable:$true] %s764
      %770 = dma.vmem_to_hbm [thread:$0]  %s763, 256, %s765, [#allocation3], 64, 64, 4
    $region29: #{tpu_custom_call.1} parent=1 // pred_fallthru
      _
    // Predicated region
    $region30: #{tpu_custom_call.1} parent=1 // pred_check
      _
    $region31: #{tpu_custom_call.1} parent=1 // pred_check_branch
      %772 = sbr.rel (0) target = $region33
    $region32: #{tpu_custom_call.1} parent=1 // pred_region
      %774 = dma.done [#allocation3], 256
    $region33: #{tpu_custom_call.1} parent=1 // pred_fallthru
      _
    %775 = vsyncpa [#allocation3], 1

</llo_original>
